<compile_context>
chip_gen: v7x
topology: tpu7x:2x2x1
jax: 0.10.0
libtpu: 0.0.40
codegen_flags: <defaults>
</compile_context>

<pallas_src>
import functools
from math import sqrt

import numpy as np
import jax
import jax.numpy as jnp
from jax import lax
from jax.experimental import pallas as pl
from jax.experimental.pallas import tpu as pltpu


# ---------------------------------------------------------------------------
# Pass 1: chunked alpha_avg = mean over the (real) sequence of
#         sigmoid(x @ W1 @ W2 + b) ** (1/16)                  -> (B, 1, H)
# ---------------------------------------------------------------------------
def _alpha_kernel(x_ref, w1_ref, w2_ref, b_ref, alpha_ref, *, seq_len, tile):
    f32 = jnp.float32
    i = pl.program_id(1)

    @pl.when(i == 0)
    def _():
        alpha_ref[...] = jnp.zeros_like(alpha_ref)

    xb = x_ref[0]                                                 # (T, H) f32
    h = jnp.dot(xb, w1_ref[...], preferred_element_type=f32)      # (T, 16)
    a = jnp.dot(h, w2_ref[...], preferred_element_type=f32) + b_ref[...]
    a = jax.nn.sigmoid(a) ** (1.0 / 16.0)                         # (T, H) f32

    # Mask rows beyond the real sequence length (zero-padded tail).
    pos = lax.broadcasted_iota(jnp.int32, (tile, 1), 0) + i * tile
    a = jnp.where(pos < seq_len, a, 0.0)

    alpha_ref[...] += jnp.sum(a, axis=0, keepdims=True).reshape(1, 1, -1)

    @pl.when(i == pl.num_programs(1) - 1)
    def _():
        alpha_ref[...] *= (1.0 / seq_len)


# ---------------------------------------------------------------------------
# Pass 2: chunked GLA recurrence.  One (batch, super-block) tile per grid
# step; the gated state S persists in VMEM scratch across the step axis.
# `group` chunks are processed per step with a short static unroll.
# ---------------------------------------------------------------------------
def _gla_chunk_kernel(x_ref, qw_ref, kw_ref, vw_ref, alpha_ref, o_ref, s_ref,
                      *, hidden_dim, chunk, group, num_full):
    f32 = jnp.float32
    bf16 = jnp.bfloat16
    i = pl.program_id(1)

    @pl.when(i == 0)
    def _():
        s_ref[...] = jnp.zeros_like(s_ref)

    # Super-block projections: one (g*c, H) @ (H, H) MXU matmul per weight
    # (bf16 operands, f32 accumulation) instead of g tiny per-chunk matmuls.
    xb = x_ref[0].astype(bf16)                                    # (g*c, H)
    qs = jnp.dot(xb, qw_ref[...], preferred_element_type=f32).astype(bf16)
    ks = jnp.dot(xb, kw_ref[...], preferred_element_type=f32).astype(bf16)
    vs = jnp.dot(xb, vw_ref[...], preferred_element_type=f32).astype(bf16)

    alpha_row = alpha_ref[0]                                      # (1, H) f32

    # Causal mask with 1/sqrt(H) folded in (hoisted; reused by every chunk).
    row = lax.broadcasted_iota(jnp.int32, (chunk, chunk), 0)
    col = lax.broadcasted_iota(jnp.int32, (chunk, chunk), 1)
    mask = jnp.where(col <= row, 1.0 / sqrt(hidden_dim), 0.0)     # (c, c) f32

    outs = []
    for j in range(group):                       # short static unroll (g <= 8)
        lo, hi = j * chunk, (j + 1) * chunk
        qb, kb, vb = qs[lo:hi], ks[lo:hi], vs[lo:hi]

        # scores = (qb @ kb^T) * tril / sqrt(H) -- contraction on last dims,
        # no materialized transpose.
        scores = lax.dot_general(qb, kb, (((1,), (1,)), ((), ())),
                                 preferred_element_type=f32) * mask

        # Gated state update: only for full chunks.  The remainder / padding
        # chunks leave S untouched and use the pre-update state, matching the
        # reference remainder semantics exactly.
        @pl.when(i * group + j < num_full)
        def _():
            s_update = lax.dot_general(kb, vb, (((0,), (0,)), ((), ())),
                                       preferred_element_type=f32)  # (H, H)
            s_ref[...] = s_ref[...] * alpha_row + s_update           # f32 state

        out = (jnp.dot(qb, s_ref[...].astype(bf16),
                       preferred_element_type=f32)
               + jnp.dot(scores.astype(bf16), vb,
                         preferred_element_type=f32))               # (c, H)
        outs.append(out)

    # Single lane-dense full-block store.
    o_ref[0] = jnp.concatenate(outs, axis=0) if group > 1 else outs[0]


# ---------------------------------------------------------------------------
# Wrapper
# ---------------------------------------------------------------------------
def gla_attention(x, params, c, *, max_group=8, target_rows=256):
    B, S, H = x.shape
    num_chunks = -(-S // c)
    num_full = S // c

    # Group several chunks per grid step: batches the projection matmuls on
    # the MXU and amortizes per-step pipeline overhead, while keeping the
    # in-kernel unroll short.
    group = max(1, min(max_group, max(1, target_rows // c), num_chunks))
    n_outer = -(-num_chunks // group)
    tile = group * c
    S_pad = n_outer * tile

    if n_outer > 1 and tile % 8 != 0:
        raise ValueError("super-block rows (group*c) must be a multiple of 8 "
                         "(f32 sublane) when the sequence spans multiple steps")

    x_pad = jnp.pad(x, ((0, 0), (0, S_pad - S), (0, 0))) if S_pad != S else x

    # bf16 weights for the MXU (halves weight DMA; f32 accumulation in-kernel).
    qw = params["Q"].astype(jnp.bfloat16)
    kw = params["K"].astype(jnp.bfloat16)
    vw = params["V"].astype(jnp.bfloat16)

    # Pass 1: alpha_avg (B, 1, H), chunked over the sequence.
    alpha_avg = pl.pallas_call(
        functools.partial(_alpha_kernel, seq_len=S, tile=tile),
        out_shape=jax.ShapeDtypeStruct((B, 1, H), jnp.float32),
        grid=(B, n_outer),
        in_specs=[
            pl.BlockSpec((1, tile, H), lambda b, i: (b, i, 0)),  # x
            pl.BlockSpec((H, 16), lambda b, i: (0, 0)),          # W1
            pl.BlockSpec((16, H), lambda b, i: (0, 0)),          # W2
            pl.BlockSpec((1, H), lambda b, i: (0, 0)),           # b
        ],
        out_specs=pl.BlockSpec((1, 1, H), lambda b, i: (b, 0, 0)),
        compiler_params=pltpu.CompilerParams(
            dimension_semantics=("parallel", "arbitrary")),
    )(x_pad, params["W1"], params["W2"], params["b"].reshape(1, H))

    # Pass 2: chunked GLA.  Per-step VMEM footprint: a couple of (tile,H)
    # tiles + 3 bf16 (H,H) weights + one f32 (H,H) state -- well within the
    # default scoped VMEM limit on v5e/v6e/v7x.
    out = pl.pallas_call(
        functools.partial(_gla_chunk_kernel, hidden_dim=H, chunk=c,
                          group=group, num_full=num_full),
        out_shape=jax.ShapeDtypeStruct((B, S_pad, H), jnp.float32),
        grid=(B, n_outer),
        in_specs=[
            pl.BlockSpec((1, tile, H), lambda b, i: (b, i, 0)),  # x super-block
            pl.BlockSpec((H, H), lambda b, i: (0, 0)),           # Q (bf16)
            pl.BlockSpec((H, H), lambda b, i: (0, 0)),           # K (bf16)
            pl.BlockSpec((H, H), lambda b, i: (0, 0)),           # V (bf16)
            pl.BlockSpec((1, 1, H), lambda b, i: (b, 0, 0)),     # alpha_avg
        ],
        out_specs=pl.BlockSpec((1, tile, H), lambda b, i: (b, i, 0)),
        scratch_shapes=[pltpu.VMEM((H, H), jnp.float32)],        # gated state S
        compiler_params=pltpu.CompilerParams(
            dimension_semantics=("parallel", "arbitrary")),
    )(x_pad, qw, kw, vw, alpha_avg)

    return out[:, :S] if S_pad != S else out


# ---------------------------------------------------------------------------
# Pure-JAX f32 reference (mirrors the PyTorch forward exactly).
# ---------------------------------------------------------------------------
def gla_reference(x, p, c):
    B, S, H = x.shape
    q = x @ p["Q"]
    k = x @ p["K"]
    v = x @ p["V"]
    alpha = jax.nn.sigmoid(x @ p["W1"] @ p["W2"] + p["b"]) ** (1.0 / 16.0)
    alpha_avg = alpha.mean(axis=1, keepdims=True)              # (B, 1, H)
    num_blocks, rem = S // c, S % c
    s = jnp.zeros((B, H, H), dtype=jnp.float32)
    mask = jnp.tril(jnp.ones((c, c), dtype=jnp.float32))
    outs = []
    for i in range(num_blocks):
        st = i * c
        qb, kb, vb = q[:, st:st + c], k[:, st:st + c], v[:, st:st + c]
        scores = jnp.einsum("bij,bkj->bik", qb, kb) * mask / sqrt(H)
        s = s * alpha_avg + jnp.einsum("bji,bjk->bik", kb, vb)
        outs.append(jnp.einsum("bij,bjk->bik", qb, s)
                    + jnp.einsum("bij,bjk->bik", scores, vb))
    if rem > 0:
        st = num_blocks * c
        qr, kr, vr = q[:, st:], k[:, st:], v[:, st:]
        rmask = jnp.tril(jnp.ones((rem, rem), dtype=jnp.float32))
        scores = jnp.einsum("bij,bkj->bik", qr, kr) * rmask / sqrt(H)
        outs.append(jnp.einsum("bij,bjk->bik", qr, s)
                    + jnp.einsum("bij,bjk->bik", scores, vr))
    return jnp.concatenate(outs, axis=1)


# ---------------------------------------------------------------------------
# Deterministic parameter init (xavier-normal analogue of the PyTorch init).
# ---------------------------------------------------------------------------
def init_params(key, hidden_dim):
    def xavier(k, shape):
        fan_out, fan_in = shape
        std = sqrt(2.0 / (fan_in + fan_out))
        return std * jax.random.normal(k, shape, dtype=jnp.float32)

    k1, k2, k3, k4, k5 = jax.random.split(key, 5)
    return {
        "Q": xavier(k1, (hidden_dim, hidden_dim)),
        "K": xavier(k2, (hidden_dim, hidden_dim)),
        "V": xavier(k3, (hidden_dim, hidden_dim)),
        "W1": xavier(k4, (hidden_dim, 16)),
        "W2": xavier(k5, (16, hidden_dim)),
        "b": jnp.zeros((hidden_dim,), dtype=jnp.float32),
    }


if __name__ == "__main__":
    hidden_dim = 128     # lane-aligned (multiple of 128)
    c = 8                # chunk: multiple of the f32 sublane (8)
    batch = 2
    seq_len = 20         # 2 full chunks of 8 + remainder of 4

    key = jax.random.PRNGKey(0)
    kx, kp = jax.random.split(key)
    x = jax.random.normal(kx, (batch, seq_len, hidden_dim), dtype=jnp.float32)
    params = init_params(kp, hidden_dim)

    out = gla_attention(x, params, c)
    out = jax.block_until_ready(out)

    ref = gla_reference(x, params, c)
    out_np, ref_np = np.asarray(out), np.asarray(ref)
    assert out_np.shape == ref_np.shape
    scale = float(np.max(np.abs(ref_np)))
    max_err = float(np.max(np.abs(out_np - ref_np)))
    # bf16 MXU operands (f32 accumulation / f32 state) vs an f32 reference.
    assert max_err <= 2e-2 * scale + 1e-3, (max_err, scale)
    print("KERNEL_OK")
</pallas_src>

<mosaic_0001>
module attributes {stable_mosaic.version = 11 : i64} {
  func.func @_alpha_kernel(%arg0: i32, %arg1: i32, %arg2: memref<1x24x128xf32, #tpu.memory_space<vmem>>, %arg3: memref<128x16xf32, #tpu.memory_space<vmem>>, %arg4: memref<16x128xf32, #tpu.memory_space<vmem>>, %arg5: memref<1x128xf32, #tpu.memory_space<vmem>>, %arg6: memref<1x1x128xf32, #tpu.memory_space<vmem>>) attributes {dimension_semantics = [#tpu.dimension_semantics<parallel>, #tpu.dimension_semantics<arbitrary>], iteration_bounds = array<i64: 2, 1>, scalar_prefetch = 0 : i64, scratch_operands = 0 : i64, tpu.core_type = #tpu.core_type<tc>, window_params = [{transform_indices = @transform_0, window_bounds = array<i64: 1, 24, 128>}, {pipeline_mode = #tpu.pipeline_mode<synchronous>, transform_indices = @transform_1, window_bounds = array<i64: 128, 16>}, {pipeline_mode = #tpu.pipeline_mode<synchronous>, transform_indices = @transform_2, window_bounds = array<i64: 16, 128>}, {pipeline_mode = #tpu.pipeline_mode<synchronous>, transform_indices = @transform_3, window_bounds = array<i64: 1, 128>}, {transform_indices = @transform_4, window_bounds = array<i64: 1, 1, 128>}]} {
    %c0_i32 = arith.constant 0 : i32
    %0 = arith.cmpi eq, %arg1, %c0_i32 : i32
    %1 = arith.extui %0 : i1 to i32
    %c0_i32_0 = arith.constant 0 : i32
    %2 = arith.cmpi ne, %1, %c0_i32_0 : i32
    scf.if %2 {
      %cst_22 = arith.constant 0.000000e+00 : f32
      %38 = vector.broadcast %cst_22 : f32 to vector<1x1x128xf32>
      %c0_23 = arith.constant 0 : index
      %c0_24 = arith.constant 0 : index
      %c0_25 = arith.constant 0 : index
      %39 = vector.load %arg6[%c0_23, %c0_24, %c0_25] : memref<1x1x128xf32, #tpu.memory_space<vmem>>, vector<1x1x128xf32>
      tpu.vector_store %arg6[%c0_23, %c0_24, %c0_25], %38 {strides = array<i32>} : memref<1x1x128xf32, #tpu.memory_space<vmem>>, vector<1x1x128xf32>,
    } else {
    }
    %c0 = arith.constant 0 : index
    %c0_1 = arith.constant 0 : index
    %c0_2 = arith.constant 0 : index
    %3 = vector.load %arg2[%c0, %c0_1, %c0_2] : memref<1x24x128xf32, #tpu.memory_space<vmem>>, vector<1x24x128xf32>
    %4 = vector.shape_cast %3 : vector<1x24x128xf32> to vector<24x128xf32>
    %c0_3 = arith.constant 0 : index
    %c0_4 = arith.constant 0 : index
    %5 = vector.load %arg3[%c0_3, %c0_4] : memref<128x16xf32, #tpu.memory_space<vmem>>, vector<128x16xf32>
    %cst = arith.constant dense<0.000000e+00> : vector<24x16xf32>
    %6 = tpu.matmul %4, %5, %cst {dimension_numbers = #tpu.dot_dimension_numbers<[1], [0], [0], [1], [0, 0, 1, 1], [], []>} : vector<24x128xf32>, vector<128x16xf32>, vector<24x16xf32> -> vector<24x16xf32>
    %c0_5 = arith.constant 0 : index
    %c0_6 = arith.constant 0 : index
    %7 = vector.load %arg4[%c0_5, %c0_6] : memref<16x128xf32, #tpu.memory_space<vmem>>, vector<16x128xf32>
    %cst_7 = arith.constant dense<0.000000e+00> : vector<24x128xf32>
    %8 = tpu.matmul %6, %7, %cst_7 {dimension_numbers = #tpu.dot_dimension_numbers<[1], [0], [0], [1], [0, 0, 1, 1], [], []>} : vector<24x16xf32>, vector<16x128xf32>, vector<24x128xf32> -> vector<24x128xf32>
    %c0_8 = arith.constant 0 : index
    %c0_9 = arith.constant 0 : index
    %9 = vector.load %arg5[%c0_8, %c0_9] : memref<1x128xf32, #tpu.memory_space<vmem>>, vector<1x128xf32>
    %10 = vector.broadcast %9 : vector<1x128xf32> to vector<24x128xf32>
    %11 = arith.addf %8, %10 : vector<24x128xf32>
    %12 = arith.negf %11 : vector<24x128xf32>
    %13 = math.exp %12 : vector<24x128xf32>
    %cst_10 = arith.constant 1.000000e+00 : f32
    %14 = vector.broadcast %cst_10 : f32 to vector<24x128xf32>
    %15 = arith.addf %14, %13 : vector<24x128xf32>
    %16 = arith.divf %14, %15 : vector<24x128xf32>
    %cst_11 = arith.constant 6.250000e-02 : f32
    %17 = vector.broadcast %cst_11 : f32 to vector<24x128xf32>
    %18 = math.powf %16, %17 : vector<24x128xf32>
    %19 = tpu.iota {dimensions = array<i32: 0>} : vector<24x1xi32>
    %c24_i32 = arith.constant 24 : i32
    %20 = arith.muli %arg1, %c24_i32 : i32
    %21 = vector.broadcast %20 : i32 to vector<24x1xi32>
    %22 = arith.addi %19, %21 : vector<24x1xi32>
    %c20_i32 = arith.constant 20 : i32
    %23 = vector.broadcast %c20_i32 : i32 to vector<24x1xi32>
    %24 = arith.cmpi slt, %22, %23 : vector<24x1xi32>
    %cst_12 = arith.constant 0.000000e+00 : f32
    %25 = vector.shape_cast %24 : vector<24x1xi1> to vector<24x1xi1>
    %26 = vector.broadcast %25 : vector<24x1xi1> to vector<24x128xi1>
    %27 = vector.broadcast %cst_12 : f32 to vector<24x128xf32>
    %28 = arith.select %26, %18, %27 : vector<24x128xi1>, vector<24x128xf32>
    %c0_13 = arith.constant 0 : index
    %c0_14 = arith.constant 0 : index
    %c0_15 = arith.constant 0 : index
    %29 = vector.load %arg6[%c0_13, %c0_14, %c0_15] : memref<1x1x128xf32, #tpu.memory_space<vmem>>, vector<1x1x128xf32>
    %cst_16 = arith.constant dense<0.000000e+00> : vector<128xf32>
    %30 = vector.multi_reduction <add>, %28, %cst_16 [0] : vector<24x128xf32> to vector<128xf32>
    %31 = vector.shape_cast %30 : vector<128xf32> to vector<1x128xf32>
    %32 = vector.shape_cast %31 : vector<1x128xf32> to vector<1x1x128xf32>
    %33 = arith.addf %29, %32 : vector<1x1x128xf32>
    %c0_17 = arith.constant 0 : index
    %c0_18 = arith.constant 0 : index
    %c0_19 = arith.constant 0 : index
    %34 = vector.load %arg6[%c0_17, %c0_18, %c0_19] : memref<1x1x128xf32, #tpu.memory_space<vmem>>, vector<1x1x128xf32>
    tpu.vector_store %arg6[%c0_17, %c0_18, %c0_19], %33 {strides = array<i32>} : memref<1x1x128xf32, #tpu.memory_space<vmem>>, vector<1x1x128xf32>,
    %c0_i32_20 = arith.constant 0 : i32
    %35 = arith.cmpi eq, %arg1, %c0_i32_20 : i32
    %36 = arith.extui %35 : i1 to i32
    %c0_i32_21 = arith.constant 0 : i32
    %37 = arith.cmpi ne, %36, %c0_i32_21 : i32
    scf.if %37 {
      %c0_22 = arith.constant 0 : index
      %c0_23 = arith.constant 0 : index
      %c0_24 = arith.constant 0 : index
      %38 = vector.load %arg6[%c0_22, %c0_23, %c0_24] : memref<1x1x128xf32, #tpu.memory_space<vmem>>, vector<1x1x128xf32>
      %cst_25 = arith.constant 5.000000e-02 : f32
      %39 = vector.broadcast %cst_25 : f32 to vector<1x1x128xf32>
      %40 = arith.mulf %38, %39 : vector<1x1x128xf32>
      %c0_26 = arith.constant 0 : index
      %c0_27 = arith.constant 0 : index
      %c0_28 = arith.constant 0 : index
      %41 = vector.load %arg6[%c0_26, %c0_27, %c0_28] : memref<1x1x128xf32, #tpu.memory_space<vmem>>, vector<1x1x128xf32>
      tpu.vector_store %arg6[%c0_26, %c0_27, %c0_28], %40 {strides = array<i32>} : memref<1x1x128xf32, #tpu.memory_space<vmem>>, vector<1x1x128xf32>,
    } else {
    }
    return
  }
  func.func @transform_0(%arg0: i32, %arg1: i32) -> (i32, i32, i32) {
    %c0_i32 = arith.constant 0 : i32
    %c0_i32_0 = arith.constant 0 : i32
    return %arg0, %arg1, %c0_i32 : i32, i32, i32
  }
  func.func @transform_1(%arg0: i32, %arg1: i32) -> (i32, i32) {
    %c0_i32 = arith.constant 0 : i32
    %c0_i32_0 = arith.constant 0 : i32
    %c0_i32_1 = arith.constant 0 : i32
    return %c0_i32, %c0_i32_0 : i32, i32
  }
  func.func @transform_2(%arg0: i32, %arg1: i32) -> (i32, i32) {
    %c0_i32 = arith.constant 0 : i32
    %c0_i32_0 = arith.constant 0 : i32
    %c0_i32_1 = arith.constant 0 : i32
    return %c0_i32, %c0_i32_0 : i32, i32
  }
  func.func @transform_3(%arg0: i32, %arg1: i32) -> (i32, i32) {
    %c0_i32 = arith.constant 0 : i32
    %c0_i32_0 = arith.constant 0 : i32
    %c0_i32_1 = arith.constant 0 : i32
    return %c0_i32, %c0_i32_0 : i32, i32
  }
  func.func @transform_4(%arg0: i32, %arg1: i32) -> (i32, i32, i32) {
    %c0_i32 = arith.constant 0 : i32
    %c0_i32_0 = arith.constant 0 : i32
    %c0_i32_1 = arith.constant 0 : i32
    return %arg0, %c0_i32, %c0_i32_0 : i32, i32, i32
  }
}

</mosaic_0001>

<llo_original>
// kernel: tpu_custom_call.1
$region0: #{tpu_custom_call.1}
  #allocation0 [shape = 'u32[]', space=smem, size = 0x4, offset = 0x4, fixed_abs, tag = 'smem constant byte address 0x4 - core index']
  #allocation1 [shape = 'u32[144,128]{1,0:T(1,128)}', space=vmem, size = 0x12000, scoped, tag = 'internal scratch']
  %s0 = inlined_call_operand.vmem [shape: f32[2,24,128], index: 0, kind: input, shape index: {}]
  %s1 = inlined_call_operand.vmem [shape: f32[128,16], index: 1, kind: input, shape index: {}]
  %s2 = inlined_call_operand.vmem [shape: f32[16,128], index: 2, kind: input, shape index: {}]
  %s3 = inlined_call_operand.vmem [shape: f32[1,128], index: 3, kind: input, shape index: {}]
  %s4 = inlined_call_operand.hbm [shape: f32[2,1,128], index: 4, kind: output, shape index: {}]
  %s5 = sld [smem:[#allocation0]]
  $region57: #{tpu_custom_call.1} parent=0
    _
  %s7 = ssub.s32 1, %s5
  %s8 = scalar_select 0, %s7, %s5
  $region1: #{tpu_custom_call.1} parent=0
    #allocation2 [shape = 'u8[1024]{0}', space=vmem, size = 0x400, scoped, tag = 'output window, operand 0']
    #allocation3 [shape = 's32[2]{0}', space=sflag, size = 0x8, scoped, tag = 'scoped memory for tpu_custom_call.1']
    %9 = vsyncpa [#allocation3], 0
    %s10 = scalar_lea.sflag [#allocation3], 1
    %11 = vsyncpa %s10, 0
    loop: start=0, step=1, limit=4
    $region2: #{tpu_custom_call.1} parent=1 // loop_pre_header
      _
    $region3: #{tpu_custom_call.1} parent=1 // loop_header
      %s13 = sphi 0, %s17
      %p14 = scmp.ge.s32.totalorder %s13, 4
      %s20 = sphi 0, %s32
      %s21 = sphi 0, %s28
      %s22 = sphi 0, %s20
      %s23 = sphi 0, %s21
      %s24 = sphi 0, %s22
      %s25 = sphi 0, %s23
      %s37 = sphi 0, %s39
      %s40 = sphi 0, %s37
      %s41 = sphi 0, %s40
      %s57 = sphi 0, %s41
      %s61 = sphi 0, %s61
      %s63 = sphi 0, %s61
      %s64 = sphi 0, %s63
      %s78 = sphi 0, %s64
      %s82 = sphi 0, %s82
      %s84 = sphi 0, %s82
      %s85 = sphi 0, %s84
      %s99 = sphi 0, %s85
      %s103 = sphi 0, %s103
      %s105 = sphi 0, %s103
      %s106 = sphi 0, %s105
      %s120 = sphi 0, %s106
      %s126 = sphi 0, %s128
      %s129 = sphi 0, %s126
      %s130 = sphi 0, %s129
      %s146 = sphi 0, %s130
    $region4: #{tpu_custom_call.1} parent=1 // loop_header_branch
      %16 = sbr.rel (%p14) target = $region8
    $region5: #{tpu_custom_call.1} parent=1 // loop_body
      %s18 = ssub.s32 %s13, 1
      %s19 = ssub.s32 %s13, 2
      %s26 = sadd.s32 1, %s21
      %p27 = scmp.ge.s32.totalorder %s26, 1
      %s28 = scalar_select %p27, 0, %s26
      %s29 = sadd.s32 1, %s20
      %s30 = scalar_select %p27, %s29, %s20
      %p31 = scmp.ge.s32.totalorder %s30, 2
      %s32 = scalar_select %p31, 0, %s30
      %s33 = ssub.s32 %s20, %s32
      %s34 = ssub.s32 %s21, %s28
      %s35 = sor.u32 %s33, %s34
      %p36 = scmp.eq.s32.totalorder %s35, 0
      %s38 = sadd.s32 %s37, 1
      %s39 = scalar_select %p36, %s37, %s38
      %p42 = pneg %p36
      %p43 = scmp.eq.s32.totalorder %s13, 1
      %p44 = por %p42, %p43
      %p45 = scmp.ne.s32.totalorder %s37, %s40
      %p46 = scmp.eq.s32.totalorder %s13, 0
      %p47 = por %p45, %p46
      %p48 = scmp.ne.s32.totalorder %s37, %s40
      %p49 = scmp.eq.s32.totalorder %s18, 1
      %p50 = por %p48, %p49
      %p51 = scmp.ne.s32.totalorder %s40, %s41
      %p52 = scmp.eq.s32.totalorder %s18, 0
      %p53 = por %p51, %p52
      %p54 = scmp.ne.s32.totalorder %s40, %s41
      %p55 = scmp.eq.s32.totalorder %s19, 1
      %p56 = por %p54, %p55
      %p58 = scmp.ne.s32.totalorder %s41, %s57
      %p59 = scmp.eq.s32.totalorder %s19, 0
      %p60 = por %p58, %p59
      %s62 = sadd.s32 %s61, 1
      %p65 = scmp.eq.s32.totalorder %s13, 1
      %p66 = scmp.ne.s32.totalorder %s61, %s63
      %p67 = scmp.eq.s32.totalorder %s13, 0
      %p68 = por %p66, %p67
      %p69 = scmp.ne.s32.totalorder %s61, %s63
      %p70 = scmp.eq.s32.totalorder %s18, 1
      %p71 = por %p69, %p70
      %p72 = scmp.ne.s32.totalorder %s63, %s64
      %p73 = scmp.eq.s32.totalorder %s18, 0
      %p74 = por %p72, %p73
      %p75 = scmp.ne.s32.totalorder %s63, %s64
      %p76 = scmp.eq.s32.totalorder %s19, 1
      %p77 = por %p75, %p76
      %p79 = scmp.ne.s32.totalorder %s64, %s78
      %p80 = scmp.eq.s32.totalorder %s19, 0
      %p81 = por %p79, %p80
      %s83 = sadd.s32 %s82, 1
      %p86 = scmp.eq.s32.totalorder %s13, 1
      %p87 = scmp.ne.s32.totalorder %s82, %s84
      %p88 = scmp.eq.s32.totalorder %s13, 0
      %p89 = por %p87, %p88
      %p90 = scmp.ne.s32.totalorder %s82, %s84
      %p91 = scmp.eq.s32.totalorder %s18, 1
      %p92 = por %p90, %p91
      %p93 = scmp.ne.s32.totalorder %s84, %s85
      %p94 = scmp.eq.s32.totalorder %s18, 0
      %p95 = por %p93, %p94
      %p96 = scmp.ne.s32.totalorder %s84, %s85
      %p97 = scmp.eq.s32.totalorder %s19, 1
      %p98 = por %p96, %p97
      %p100 = scmp.ne.s32.totalorder %s85, %s99
      %p101 = scmp.eq.s32.totalorder %s19, 0
      %p102 = por %p100, %p101
      %s104 = sadd.s32 %s103, 1
      %p107 = scmp.eq.s32.totalorder %s13, 1
      %p108 = scmp.ne.s32.totalorder %s103, %s105
      %p109 = scmp.eq.s32.totalorder %s13, 0
      %p110 = por %p108, %p109
      %p111 = scmp.ne.s32.totalorder %s103, %s105
      %p112 = scmp.eq.s32.totalorder %s18, 1
      %p113 = por %p111, %p112
      %p114 = scmp.ne.s32.totalorder %s105, %s106
      %p115 = scmp.eq.s32.totalorder %s18, 0
      %p116 = por %p114, %p115
      %p117 = scmp.ne.s32.totalorder %s105, %s106
      %p118 = scmp.eq.s32.totalorder %s19, 1
      %p119 = por %p117, %p118
      %p121 = scmp.ne.s32.totalorder %s106, %s120
      %p122 = scmp.eq.s32.totalorder %s19, 0
      %p123 = por %p121, %p122
      %s124 = ssub.s32 %s20, %s32
      %p125 = scmp.eq.s32.totalorder %s124, 0
      %s127 = sadd.s32 %s126, 1
      %s128 = scalar_select %p125, %s126, %s127
      %p131 = pneg %p125
      %p132 = scmp.eq.s32.totalorder %s13, 1
      %p133 = por %p131, %p132
      %p134 = scmp.ne.s32.totalorder %s126, %s129
      %p135 = scmp.eq.s32.totalorder %s13, 0
      %p136 = por %p134, %p135
      %p137 = scmp.ne.s32.totalorder %s126, %s129
      %p138 = scmp.eq.s32.totalorder %s18, 1
      %p139 = por %p137, %p138
      %p140 = scmp.ne.s32.totalorder %s129, %s130
      %p141 = scmp.eq.s32.totalorder %s18, 0
      %p142 = por %p140, %p141
      %p143 = scmp.ne.s32.totalorder %s129, %s130
      %p144 = scmp.eq.s32.totalorder %s19, 1
      %p145 = por %p143, %p144
      %p147 = scmp.ne.s32.totalorder %s130, %s146
      %p148 = scmp.eq.s32.totalorder %s19, 0
      %p149 = por %p147, %p148
      %p150 = scmp.le.s32.totalorder 1, %s13
      %p151 = scmp.lt.s32.totalorder %s13, 3
      %p152 = pnand %p150, %p151
      %p153 = pneg %p152
      // Predicated region
      $region9: #{tpu_custom_call.1} parent=5 // pred_check
        _
      $region10: #{tpu_custom_call.1} parent=5 // pred_check_branch
        %155 = sbr.rel (%p152) target = $region12
      $region11: #{tpu_custom_call.1} parent=5 // pred_region
        %s156 = ssub.s32 %s13, 1
        // Predicated region
        $region13: #{tpu_custom_call.1} parent=11 // pred_check
          %p157 = pneg %p74
        $region14: #{tpu_custom_call.1} parent=11 // pred_check_branch
          %159 = sbr.rel (%p157) target = $region16
        $region15: #{tpu_custom_call.1} parent=11 // pred_region
          _
        $region16: #{tpu_custom_call.1} parent=11 // pred_fallthru
          _
        // Predicated region
        $region17: #{tpu_custom_call.1} parent=11 // pred_check
          %p160 = pneg %p95
        $region18: #{tpu_custom_call.1} parent=11 // pred_check_branch
          %162 = sbr.rel (%p160) target = $region20
        $region19: #{tpu_custom_call.1} parent=11 // pred_region
          _
        $region20: #{tpu_custom_call.1} parent=11 // pred_fallthru
          _
        // Predicated region
        $region21: #{tpu_custom_call.1} parent=11 // pred_check
          %p163 = pneg %p116
        $region22: #{tpu_custom_call.1} parent=11 // pred_check_branch
          %165 = sbr.rel (%p163) target = $region24
        $region23: #{tpu_custom_call.1} parent=11 // pred_region
          _
        $region24: #{tpu_custom_call.1} parent=11 // pred_fallthru
          _
      $region12: #{tpu_custom_call.1} parent=5 // pred_fallthru
        _
      %p166 = scmp.lt.s32.totalorder %s13, 2
      // Predicated region
      $region25: #{tpu_custom_call.1} parent=5 // pred_check
        %p167 = pneg %p166
      $region26: #{tpu_custom_call.1} parent=5 // pred_check_branch
        %169 = sbr.rel (%p167) target = $region28
      $region27: #{tpu_custom_call.1} parent=5 // pred_region
        // Predicated region
        $region29: #{tpu_custom_call.1} parent=27 // pred_check
          %p170 = pneg %p47
        $region30: #{tpu_custom_call.1} parent=27 // pred_check_branch
          %172 = sbr.rel (%p170) target = $region32
        $region31: #{tpu_custom_call.1} parent=27 // pred_region
          %s173 = smul.u32 3, %s21
          %p174 = scmp.lt.s32.totalorder %s20, 1
          %s175 = scalar_select %p174, %s20, 1
          %p176 = scmp.lt.s32.totalorder %s173, 2
          %s177 = scalar_select %p176, %s173, 2
          %s178 = smul.addr %s175, 3
          %s179 = sadd.s32 %s177, %s178
          %s180 = smul.addr %s179, 8
          %s181 = scalar_lea.vmem %s0, %s180
          %s182 = smul.u32 3, %s21
        $region32: #{tpu_custom_call.1} parent=27 // pred_fallthru
          _
      $region28: #{tpu_custom_call.1} parent=5 // pred_fallthru
        _
      %p183 = scmp.le.s32.totalorder 1, %s13
      %p184 = scmp.lt.s32.totalorder %s13, 3
      %p185 = pnand %p183, %p184
      %p186 = pneg %p185
      // Predicated region
      $region33: #{tpu_custom_call.1} parent=5 // pred_check
        _
      $region34: #{tpu_custom_call.1} parent=5 // pred_check_branch
        %188 = sbr.rel (%p185) target = $region36
      $region35: #{tpu_custom_call.1} parent=5 // pred_region
        %s189 = ssub.s32 %s13, 1
        %s190 = smul.u32 3, %s23
        %p191 = scmp.lt.s32.totalorder %s22, 1
        %s192 = scalar_select %p191, %s22, 1
        %p193 = scmp.lt.s32.totalorder %s190, 2
        %s194 = scalar_select %p193, %s190, 2
        %s195 = smul.addr %s192, 3
        %s196 = sadd.s32 %s194, %s195
        %s197 = smul.addr %s196, 8
        %s198 = scalar_lea.vmem %s0, %s197
        %p199 = pneg %p53
        %p200 = pneg %p50
        %p201 = pneg %p74
        %p202 = pneg %p71
        %p203 = pneg %p95
        %p204 = pneg %p92
        %p205 = pneg %p116
        %p206 = pneg %p113
        %p207 = pneg %p142
        %p208 = pneg %p139
        %s209 = sand.u32 %s129, 1
        %s210 = scalar_lea.sflag [#allocation3], %s209
        %s211 = sand.u32 %s129, 1
        %s212 = scalar_lea.vmem [#allocation2], %s211
        %s213 = smul.u32 3, %s23
        %p214 = scmp.lt.s32.totalorder %s22, 1
        %s215 = scalar_select %p214, %s22, 1
        %p216 = scmp.lt.s32.totalorder %s213, 2
        %s217 = scalar_select %p216, %s213, 2
        %s218 = smul.addr %s215, 3
        %s219 = sadd.s32 %s217, %s218
        %s220 = smul.addr %s219, 8
        %s221 = scalar_lea.vmem %s0, %s220
        %s222 = smul.u32 3, %s23
        %p223 = scmp.eq.s32.totalorder %s23, 0
        // Predicated region
        $region37: #{tpu_custom_call.1} parent=35 // pred_check
          %p224 = pneg %p223
        $region38: #{tpu_custom_call.1} parent=35 // pred_check_branch
          %226 = sbr.rel (%p224) target = $region40
        $region39: #{tpu_custom_call.1} parent=35 // pred_region
          %227 = vst [vmem:[%s212] sm:$0x1] 0.0
        $region40: #{tpu_custom_call.1} parent=35 // pred_fallthru
          _
        %v228 = vld [vmem:[%s221] sm:$0xff]
        %v229 = vld [vmem:[%s221 + $0x8] sm:$0xff]
        %v230 = vld [vmem:[%s221 + $0x10] sm:$0xff]
        %v231 = vld [vmem:[%s1] sm:$0xff]
        %v232 = vld [vmem:[%s1 + $0x8] sm:$0xff]
        %v233 = vld [vmem:[%s1 + $0x10] sm:$0xff]
        %v234 = vld [vmem:[%s1 + $0x18] sm:$0xff]
        %v235 = vld [vmem:[%s1 + $0x20] sm:$0xff]
        %v236 = vld [vmem:[%s1 + $0x28] sm:$0xff]
        %v237 = vld [vmem:[%s1 + $0x30] sm:$0xff]
        %v238 = vld [vmem:[%s1 + $0x38] sm:$0xff]
        %v239 = vld [vmem:[%s1 + $0x40] sm:$0xff]
        %v240 = vld [vmem:[%s1 + $0x48] sm:$0xff]
        %v241 = vld [vmem:[%s1 + $0x50] sm:$0xff]
        %v242 = vld [vmem:[%s1 + $0x58] sm:$0xff]
        %v243 = vld [vmem:[%s1 + $0x60] sm:$0xff]
        %v244 = vld [vmem:[%s1 + $0x68] sm:$0xff]
        %v245 = vld [vmem:[%s1 + $0x70] sm:$0xff]
        %v246 = vld [vmem:[%s1 + $0x78] sm:$0xff]
        %247 = vmatprep.subr.mxu0 0.0
        %248 = vmatpush1.msra.mxu0 %v231
        %249 = vmatprep.subr.mxu0 0.0
        %250 = vmatpush1.msra.mxu0 %v232
        %251 = vmatprep.subr.mxu0 0.0
        %252 = vmatpush1.msra.mxu0 %v233
        %253 = vmatprep.subr.mxu0 0.0
        %254 = vmatpush1.msra.mxu0 %v234
        %255 = vmatprep.subr.mxu0 0.0
        %256 = vmatpush1.msra.mxu0 %v235
        %257 = vmatprep.subr.mxu0 0.0
        %258 = vmatpush1.msra.mxu0 %v236
        %259 = vmatprep.subr.mxu0 0.0
        %260 = vmatpush1.msra.mxu0 %v237
        %261 = vmatprep.subr.mxu0 0.0
        %262 = vmatpush1.msra.mxu0 %v238
        %263 = vmatprep.subr.mxu0 0.0
        %264 = vmatpush1.msra.mxu0 %v239
        %265 = vmatprep.subr.mxu0 0.0
        %266 = vmatpush1.msra.mxu0 %v240
        %267 = vmatprep.subr.mxu0 0.0
        %268 = vmatpush1.msra.mxu0 %v241
        %269 = vmatprep.subr.mxu0 0.0
        %270 = vmatpush1.msra.mxu0 %v242
        %271 = vmatprep.subr.mxu0 0.0
        %272 = vmatpush1.msra.mxu0 %v243
        %273 = vmatprep.subr.mxu0 0.0
        %274 = vmatpush1.msra.mxu0 %v244
        %275 = vmatprep.subr.mxu0 0.0
        %276 = vmatpush1.msra.mxu0 %v245
        %277 = vmatprep.subr.mxu0 0.0
        %278 = vmatpush1.msra.mxu0 %v246
        %279 = vmatprep.subr.mxu0 0.0
        %280 = vmatpush1.msra.mxu0 0.0
        %281 = vmatprep.subr.mxu0 0.0
        %282 = vmatpush1.msra.mxu0 0.0
        %283 = vmatprep.subr.mxu0 0.0
        %284 = vmatpush1.msra.mxu0 0.0
        %285 = vmatprep.subr.mxu0 0.0
        %286 = vmatpush1.msra.mxu0 0.0
        %287 = vmatprep.subr.mxu0 0.0
        %288 = vmatpush1.msra.mxu0 0.0
        %289 = vmatprep.subr.mxu0 0.0
        %290 = vmatpush1.msra.mxu0 0.0
        %291 = vmatprep.subr.mxu0 0.0
        %292 = vmatpush1.msra.mxu0 0.0
        %293 = vmatprep.subr.mxu0 0.0
        %294 = vmatpush1.msra.mxu0 0.0
        %295 = vmatprep.subr.mxu0 0.0
        %296 = vmatpush1.msra.mxu0 0.0
        %297 = vmatprep.subr.mxu0 0.0
        %298 = vmatpush1.msra.mxu0 0.0
        %299 = vmatprep.subr.mxu0 0.0
        %300 = vmatpush1.msra.mxu0 0.0
        %301 = vmatprep.subr.mxu0 0.0
        %302 = vmatpush1.msra.mxu0 0.0
        %303 = vmatprep.subr.mxu0 0.0
        %304 = vmatpush1.msra.mxu0 0.0
        %305 = vmatprep.subr.mxu0 0.0
        %306 = vmatpush1.msra.mxu0 0.0
        %307 = vmatprep.subr.mxu0 0.0
        %308 = vmatpush1.msra.mxu0 0.0
        %309 = vmatprep.subr.mxu0 0.0
        %310 = vmatpush1.msra.mxu0 0.0
        %311 = vmatprep.mubr.f32.mxu0 0.0
        %312 = vmatmul.mubr.f32.gmra.mrb[0].mxu0 %v228
        %v313 = vpop.f32.mrb[0].mxu0
        %v314 = vadd.f32 0.0, %v313
        %v315 = vpop.f32.mrb[0].mxu0
        %316 = vmatprep.mubr.f32.mxu0 0.0
        %317 = vmatmul.mubr.f32.gmra.mrb[0].mxu0 %v229
        %v318 = vpop.f32.mrb[0].mxu0
        %v319 = vadd.f32 0.0, %v318
        %v320 = vpop.f32.mrb[0].mxu0
        %321 = vmatprep.mubr.f32.mxu0 0.0
        %322 = vmatmul.mubr.f32.gmra.mrb[0].mxu0 %v230
        %v323 = vpop.f32.mrb[0].mxu0
        %v324 = vadd.f32 0.0, %v323
        %v325 = vpop.f32.mrb[0].mxu0
        %326 = vdwg.mxu0
        %v327 = vld [vmem:[%s2] sm:$0xff]
        %v328 = vld [vmem:[%s2 + $0x8] sm:$0xff]
        %v329 = vld [vmem:[%s3] sm:$0x1]
        %v331 = vlaneseq
        %v332 = vshrl.u32 %v331, 7
        %v333 = vsub.s32 0, %v332
        %v334 = vrot.slane %v329, %v333
        %vm336 = vcmask 130048
        %v338 = vsel %vm336, %v314, 0
        %v341 = vsel %vm336, %v319, 0
        %v344 = vsel %vm336, %v324, 0
        %346 = vmatprep.subr.mxu0 0.0
        %347 = vmatpush1.msra.mxu0 %v327
        %348 = vmatprep.subr.mxu0 0.0
        %349 = vmatpush1.msra.mxu0 %v328
        %350 = vmatprep.subr.mxu0 0.0
        %351 = vmatpush1.msra.mxu0 0.0
        %352 = vmatprep.subr.mxu0 0.0
        %353 = vmatpush1.msra.mxu0 0.0
        %354 = vmatprep.subr.mxu0 0.0
        %355 = vmatpush1.msra.mxu0 0.0
        %356 = vmatprep.subr.mxu0 0.0
        %357 = vmatpush1.msra.mxu0 0.0
        %358 = vmatprep.subr.mxu0 0.0
        %359 = vmatpush1.msra.mxu0 0.0
        %360 = vmatprep.subr.mxu0 0.0
        %361 = vmatpush1.msra.mxu0 0.0
        %362 = vmatprep.subr.mxu0 0.0
        %363 = vmatpush1.msra.mxu0 0.0
        %364 = vmatprep.subr.mxu0 0.0
        %365 = vmatpush1.msra.mxu0 0.0
        %366 = vmatprep.subr.mxu0 0.0
        %367 = vmatpush1.msra.mxu0 0.0
        %368 = vmatprep.subr.mxu0 0.0
        %369 = vmatpush1.msra.mxu0 0.0
        %370 = vmatprep.subr.mxu0 0.0
        %371 = vmatpush1.msra.mxu0 0.0
        %372 = vmatprep.subr.mxu0 0.0
        %373 = vmatpush1.msra.mxu0 0.0
        %374 = vmatprep.subr.mxu0 0.0
        %375 = vmatpush1.msra.mxu0 0.0
        %376 = vmatprep.subr.mxu0 0.0
        %377 = vmatpush1.msra.mxu0 0.0
        %378 = vmatprep.subr.mxu0 0.0
        %379 = vmatpush1.msra.mxu0 0.0
        %380 = vmatprep.subr.mxu0 0.0
        %381 = vmatpush1.msra.mxu0 0.0
        %382 = vmatprep.subr.mxu0 0.0
        %383 = vmatpush1.msra.mxu0 0.0
        %384 = vmatprep.subr.mxu0 0.0
        %385 = vmatpush1.msra.mxu0 0.0
        %386 = vmatprep.subr.mxu0 0.0
        %387 = vmatpush1.msra.mxu0 0.0
        %388 = vmatprep.subr.mxu0 0.0
        %389 = vmatpush1.msra.mxu0 0.0
        %390 = vmatprep.subr.mxu0 0.0
        %391 = vmatpush1.msra.mxu0 0.0
        %392 = vmatprep.subr.mxu0 0.0
        %393 = vmatpush1.msra.mxu0 0.0
        %394 = vmatprep.subr.mxu0 0.0
        %395 = vmatpush1.msra.mxu0 0.0
        %396 = vmatprep.subr.mxu0 0.0
        %397 = vmatpush1.msra.mxu0 0.0
        %398 = vmatprep.subr.mxu0 0.0
        %399 = vmatpush1.msra.mxu0 0.0
        %400 = vmatprep.subr.mxu0 0.0
        %401 = vmatpush1.msra.mxu0 0.0
        %402 = vmatprep.subr.mxu0 0.0
        %403 = vmatpush1.msra.mxu0 0.0
        %404 = vmatprep.subr.mxu0 0.0
        %405 = vmatpush1.msra.mxu0 0.0
        %406 = vmatprep.subr.mxu0 0.0
        %407 = vmatpush1.msra.mxu0 0.0
        %408 = vmatprep.subr.mxu0 0.0
        %409 = vmatpush1.msra.mxu0 0.0
        %410 = vmatprep.mubr.f32.mxu0 0.0
        %411 = vmatmul.mubr.f32.gmra.mrb[0].mxu0 %v338
        %v412 = vpop.f32.mrb[0].mxu0
        %v413 = vadd.f32 %v334, %v412
        %v414 = vpop.f32.mrb[0].mxu0
        %415 = vmatprep.mubr.f32.mxu0 0.0
        %416 = vmatmul.mubr.f32.gmra.mrb[0].mxu0 %v341
        %v417 = vpop.f32.mrb[0].mxu0
        %v418 = vadd.f32 %v334, %v417
        %v419 = vpop.f32.mrb[0].mxu0
        %420 = vmatprep.mubr.f32.mxu0 0.0
        %421 = vmatmul.mubr.f32.gmra.mrb[0].mxu0 %v344
        %v422 = vpop.f32.mrb[0].mxu0
        %v423 = vadd.f32 %v334, %v422
        %v424 = vpop.f32.mrb[0].mxu0
        %425 = vdwg.mxu0
        %v426 = vxor.u32 %v413, 2147483648
        %v427 = vxor.u32 %v418, 2147483648
        %v428 = vxor.u32 %v423, 2147483648
        %v429 = vmul.f32 %v426, 1.442695
        %v430 = vpow.pop %v429
        %v431 = vmul.f32 %v427, 1.442695
        %v432 = vpow.pop %v431
        %v433 = vmul.f32 %v428, 1.442695
        %v434 = vpow.pop %v433
        %v435 = vadd.f32 %v430, 1.0
        %v436 = vadd.f32 %v432, 1.0
        %v437 = vadd.f32 %v434, 1.0
        %v438 = vrcp.pop %v435
        %v439 = vmul.f32 1.0, %v438
        %v440 = vrcp.pop %v436
        %v441 = vmul.f32 1.0, %v440
        %v442 = vrcp.pop %v437
        %v443 = vmul.f32 1.0, %v442
        %v444 = vpow.f32 %v439, 0.0625
        %v445 = vpow.f32 %v441, 0.0625
        %v446 = vpow.f32 %v443, 0.0625
        %v447 = vlaneseq
        %v448 = vshrl.u32 %v447, 7
        %v449 = vadd.s32 %v448, 8
        %v450 = vadd.s32 %v448, 16
        %s451 = smul.u32 %s23, 24
        %v452 = vstv %s451
        %v453 = vadd.s32 %v448, %v452
        %v454 = vadd.s32 %v449, %v452
        %v455 = vadd.s32 %v450, %v452
        %vm456 = vcmp.lt.s32.totalorder %v453, 20
        %vm457 = vcmp.lt.s32.totalorder %v454, 20
        %vm458 = vcmp.lt.s32.totalorder %v455, 20
        %v459 = vsel %vm456, 1, 0
        %v460 = vsel %vm457, 1, 0
        %v461 = vsel %vm458, 1, 0
        %vm462 = vcmp.eq.s32.totalorder %v459, 1
        %vm463 = vcmp.eq.s32.totalorder %v460, 1
        %vm464 = vcmp.eq.s32.totalorder %v461, 1
        %v465 = vsel %vm462, %v444, 0.0
        %v466 = vsel %vm463, %v445, 0.0
        %v467 = vsel %vm464, %v446, 0.0
        %v468 = vld [vmem:[%s212] sm:$0x1]
        %v469 = vadd.f32 %v465, %v466
        %v470 = vadd.f32 %v469, %v467
        %v471 = vrot.slane %v470, 4
        %v472 = vadd.f32 %v470, %v471
        %v473 = vrot.slane %v472, 2
        %v474 = vadd.f32 %v472, %v473
        %v475 = vrot.slane %v474, 1
        %v476 = vadd.f32 %v474, %v475
        %v477 = vadd.f32 %v468, %v476
        %478 = vst [vmem:[%s212] sm:$0x1] %v477
        // Predicated region
        $region41: #{tpu_custom_call.1} parent=35 // pred_check
          %p479 = pneg %p223
        $region42: #{tpu_custom_call.1} parent=35 // pred_check_branch
          %481 = sbr.rel (%p479) target = $region44
        $region43: #{tpu_custom_call.1} parent=35 // pred_region
          %v482 = vld [vmem:[%s212] sm:$0x1]
          %v483 = vmul.f32 %v482, 0.05
          %484 = vst [vmem:[%s212] sm:$0x1] %v483
        $region44: #{tpu_custom_call.1} parent=35 // pred_fallthru
          _
        %s485 = sand.u32 %s129, 1
        %s486 = scalar_lea.sflag [#allocation3], %s485
        %s487 = sand.u32 %s129, 1
        %s488 = scalar_lea.vmem [#allocation2], %s487
        // Predicated region
        $region45: #{tpu_custom_call.1} parent=35 // pred_check
          %p489 = pneg %p139
        $region46: #{tpu_custom_call.1} parent=35 // pred_check_branch
          %491 = sbr.rel (%p489) target = $region48
        $region47: #{tpu_custom_call.1} parent=35 // pred_region
          %s493 = ssub.s32 16, 16
          %494 = vsyncadd %s486, %s493
          %s495 = smul.addr %s22, 16
          %s496 = scalar_lea.hbm %s4, %s495
          %s498 = sshll.u32 %s488, 4
          %s499 = int_to_ptr.vmem [resolvable:$true] %s498
          %501 = dma.vmem_to_hbm [thread:$0]  %s499, 16, %s496, %s486
        $region48: #{tpu_custom_call.1} parent=35 // pred_fallthru
          _
      $region36: #{tpu_custom_call.1} parent=5 // pred_fallthru
        _
      %p502 = scmp.le.s32.totalorder 2, %s13
      // Predicated region
      $region49: #{tpu_custom_call.1} parent=5 // pred_check
        %p503 = pneg %p502
      $region50: #{tpu_custom_call.1} parent=5 // pred_check_branch
        %505 = sbr.rel (%p503) target = $region52
      $region51: #{tpu_custom_call.1} parent=5 // pred_region
        %s506 = ssub.s32 %s13, 2
        // Predicated region
        $region53: #{tpu_custom_call.1} parent=51 // pred_check
          %p507 = pneg %p145
        $region54: #{tpu_custom_call.1} parent=51 // pred_check_branch
          %509 = sbr.rel (%p507) target = $region56
        $region55: #{tpu_custom_call.1} parent=51 // pred_region
          %s510 = sand.u32 %s130, 1
          %s511 = scalar_lea.sflag [#allocation3], %s510
          %s512 = sand.u32 %s130, 1
          %s513 = scalar_lea.vmem [#allocation2], %s512
          %514 = dma.done %s511, 16
        $region56: #{tpu_custom_call.1} parent=51 // pred_fallthru
          _
      $region52: #{tpu_custom_call.1} parent=5 // pred_fallthru
        _
    $region6: #{tpu_custom_call.1} parent=1 // loop_footer
      %s17 = sadd.s32 1, %s13
    $region7: #{tpu_custom_call.1} parent=1 // loop_footer_branch
      %12 = sbr.rel target = $region3
    $region8: #{tpu_custom_call.1} parent=1 // loop_exit
      _
    %515 = vsyncpa [#allocation3], 1
    %s516 = scalar_lea.sflag [#allocation3], 1
    %517 = vsyncpa %s516, 1

</llo_original>
